<compile_context>
chip_gen: v6e
topology: v6e:2x2x1
jax: 0.10.0
libtpu: 0.0.40
codegen_flags: <defaults>
</compile_context>

<pallas_src>
import functools

import jax
import jax.numpy as jnp
from jax.experimental import pallas as pl
from jax.experimental.pallas import tpu as pltpu


# ---------------- math helpers (kernel side) ----------------------------------------------

def _layer_norm_kernel(h, gamma, beta, eps=1e-5):
    # E[x^2] - mu^2 form: one fewer full-block subtract pass than the centered form.
    mu = jnp.mean(h, axis=-1, keepdims=True)
    var = jnp.maximum(jnp.mean(h * h, axis=-1, keepdims=True) - mu * mu, 0.0)
    return (h - mu) * jax.lax.rsqrt(var + eps) * gamma + beta


def _erf(x, approx_recip):
    # Abramowitz & Stegun 7.1.26 rational approximation (max abs err ~1.5e-7), built only
    # from ops with guaranteed Mosaic lowerings. exp (and the approx reciprocal) run on the
    # EUP, off the VALU slot.
    a1, a2, a3, a4, a5 = 0.254829592, -0.284496736, 1.421413741, -1.453152027, 1.061405429
    p = 0.3275911
    sgn = jnp.where(x >= 0.0, 1.0, -1.0)
    ax = jnp.abs(x)
    denom = 1.0 + p * ax
    t = pl.reciprocal(denom, approx=True) if approx_recip else 1.0 / denom
    poly = t * (a1 + t * (a2 + t * (a3 + t * (a4 + t * a5))))
    return sgn * (1.0 - poly * jnp.exp(-ax * ax))


def _gelu_exact(x, approx_recip):
    # PyTorch nn.GELU() default = exact erf-based GELU.
    return 0.5 * x * (1.0 + _erf(x * 0.7071067811865476, approx_recip))


# ---------------- Pallas kernel ------------------------------------------------------------

def qac_kernel(x_ref, w_ref, v_ref, o_ref, *, bt, q, din, h, h4, o, approx_recip):
    # x_ref: (bt*q, din) compute-dtype rows for this grid step.
    # w_ref: (4, Kmax, Nmax) packed weights (w1, w2, w3, w4), zero padded.
    # v_ref: (8, Nmax) f32 packed vectors: b1, g1, be1, b2, b3, b4, g2, be2.
    # o_ref: (bt*q, o).
    x = x_ref[...]
    cdt = w_ref.dtype

    v = v_ref[...]                                           # (8, Nmax), f32
    b1, g1, be1 = v[0:1, :h], v[1:2, :h], v[2:3, :h]
    b2 = v[3:4, :h4]
    b3 = v[4:5, :h]
    b4, g2, be2 = v[5:6, :o], v[6:7, :o], v[7:8, :o]

    w1 = w_ref[0, :din, :h]                                  # (din, h)
    w2 = w_ref[1, :h, :h4]                                   # (h, h4)
    w3 = w_ref[2, :h4, :h]                                   # (h4, h)
    w4 = w_ref[3, :h, :o]                                    # (h, o)

    # group_fc: Linear -> LayerNorm -> GELU (f32 accumulation / elementwise math)
    hb = jnp.dot(x, w1, preferred_element_type=jnp.float32) + b1
    hb = _layer_norm_kernel(hb, g1, be1)
    hb = _gelu_exact(hb, approx_recip)                       # (bt*q, h), f32

    # SE branch: per-batch mean over the query axis (PyTorch dim=1, keepdim=True)
    h3 = hb.reshape(bt, q, h)                                # (bt, q, h)
    avg = jnp.mean(h3, axis=1)                               # (bt, h)
    s = jnp.dot(avg.astype(cdt), w2, preferred_element_type=jnp.float32) + b2
    s = jnp.maximum(s, 0.0)                                  # ReLU
    s = jnp.dot(s.astype(cdt), w3, preferred_element_type=jnp.float32) + b3
    s = jax.nn.sigmoid(s)                                    # (bt, h), f32

    # gate each batch element's queries with its own SE weights
    g = (h3 * s[:, None, :]).reshape(bt * q, h)              # (bt*q, h)

    # final_fc: Linear -> LayerNorm
    out = jnp.dot(g.astype(cdt), w4, preferred_element_type=jnp.float32) + b4
    out = _layer_norm_kernel(out, g2, be2)                   # (bt*q, o)

    o_ref[...] = out.astype(o_ref.dtype)


# ---------------- parameter packing (done once, outside the per-call wrapper) --------------

def pack_params(p, compute_dtype=jnp.bfloat16):
    """Pack the 13 module parameters into two arrays (one weight slab, one vector slab)."""
    din, h = p["w1"].shape
    h4 = p["w2"].shape[1]
    o = p["w4"].shape[1]
    kmax = max(din, h, h4)
    nmax = max(h, h4, o)

    def pad_w(w):
        z = jnp.zeros((kmax, nmax), compute_dtype)
        return z.at[: w.shape[0], : w.shape[1]].set(w.astype(compute_dtype))

    w_slab = jnp.stack([pad_w(p["w1"]), pad_w(p["w2"]), pad_w(p["w3"]), pad_w(p["w4"])])

    def pad_v(v):
        v = v.reshape(-1).astype(jnp.float32)
        return jnp.zeros((nmax,), jnp.float32).at[: v.shape[0]].set(v)

    v_slab = jnp.stack(
        [pad_v(p[k]) for k in ("b1", "g1", "be1", "b2", "b3", "b4", "g2", "be2")])

    dims = {"din": din, "h": h, "h4": h4, "o": o}
    return w_slab, v_slab, dims


# ---------------- wrapper -------------------------------------------------------------------

def _default_batch_tile(B, Q, row_cap, sub):
    if B * Q <= row_cap:
        return B
    cands = [d for d in range(1, B + 1)
             if B % d == 0 and d * Q <= row_cap and (d * Q) % sub == 0]
    return max(cands) if cands else B


def query_aware_classifier(x, packed, *, batch_tile=None, row_cap=4096,
                           out_dtype=jnp.float32, approx_recip=True):
    """x: (B, Q, Din) float32; packed: output of pack_params(). Returns (B, Q, O)."""
    w_slab, v_slab, dims = packed
    B, Q, Din = x.shape
    assert Din == dims["din"], (Din, dims["din"])
    H, H4, O = dims["h"], dims["h4"], dims["o"]
    cdt = w_slab.dtype

    # Sublane-packing requirement on the row count when the grid has >1 step
    # (bf16 x -> 16 rows, f32 -> 8 rows; output is at least as permissive).
    sub = 8 * (4 // jnp.dtype(cdt).itemsize)
    sub = max(sub, 8 * (4 // jnp.dtype(out_dtype).itemsize))

    if batch_tile is None:
        batch_tile = _default_batch_tile(B, Q, row_cap, sub)
    assert B % batch_tile == 0, (B, batch_tile)
    n_steps = B // batch_tile
    rows = batch_tile * Q
    if n_steps > 1:
        assert rows % sub == 0, (
            f"batch_tile*Q={rows} must be a multiple of {sub} for dtype {cdt} blocks")

    # Flat 2-D (rows, features) layout; reshape is metadata, the cast halves x's DMA bytes
    # when cdt is bf16.
    x2 = x.reshape(B * Q, Din).astype(cdt)

    itemsize = jnp.dtype(cdt).itemsize
    flops = 2 * B * Q * (Din * H + H * O) + 2 * B * (H * H4 + H4 * H)
    transcendentals = B * Q * H + B * H                         # exp in GELU + sigmoid
    bytes_accessed = (B * Q * Din * itemsize
                      + B * Q * O * jnp.dtype(out_dtype).itemsize
                      + w_slab.size * itemsize + v_slab.size * 4)

    kernel = functools.partial(qac_kernel, bt=batch_tile, q=Q, din=Din, h=H, h4=H4, o=O,
                               approx_recip=approx_recip)

    out2 = pl.pallas_call(
        kernel,
        out_shape=jax.ShapeDtypeStruct((B * Q, O), out_dtype),
        grid=(n_steps,),
        in_specs=[
            pl.BlockSpec((rows, Din), lambda i: (i, 0)),          # x rows per step
            pl.BlockSpec(w_slab.shape, lambda i: (0, 0, 0)),      # packed weights (resident)
            pl.BlockSpec(v_slab.shape, lambda i: (0, 0)),         # packed vectors (resident)
        ],
        out_specs=pl.BlockSpec((rows, O), lambda i: (i, 0)),
        compiler_params=pltpu.CompilerParams(dimension_semantics=("parallel",)),
        cost_estimate=pl.CostEstimate(flops=flops, transcendentals=transcendentals,
                                      bytes_accessed=bytes_accessed),
    )(x2, w_slab, v_slab)

    return out2.reshape(B, Q, O)


# ---------------- pure-JAX reference (matches the PyTorch module, f32) ----------------------

def reference(x, p):
    def ln(h, gamma, beta, eps=1e-5):
        mu = jnp.mean(h, axis=-1, keepdims=True)
        var = jnp.mean((h - mu) ** 2, axis=-1, keepdims=True)
        return (h - mu) * jax.lax.rsqrt(var + eps) * gamma + beta

    h = x @ p["w1"] + p["b1"][0]
    h = ln(h, p["g1"][0], p["be1"][0])
    h = jax.nn.gelu(h, approximate=False)
    avg = jnp.mean(h, axis=1, keepdims=True)
    s = jnp.maximum(avg @ p["w2"] + p["b2"][0], 0.0)
    s = jax.nn.sigmoid(s @ p["w3"] + p["b3"][0])
    h = h * s
    out = h @ p["w4"] + p["b4"][0]
    return ln(out, p["g2"][0], p["be2"][0])


# ---------------- main -----------------------------------------------------------------------

if __name__ == "__main__":
    B, Q = 2, 8
    input_dim, output_dim, expansion = 32, 16, 2
    H = input_dim * expansion
    H4 = H // 4

    key = jax.random.PRNGKey(0)
    keys = jax.random.split(key, 9)

    def lin_init(k, fan_in, shape):
        return jax.random.uniform(k, shape, jnp.float32, -1.0, 1.0) / jnp.sqrt(float(fan_in))

    params = {
        "w1": lin_init(keys[0], input_dim, (input_dim, H)),
        "b1": lin_init(keys[1], input_dim, (1, H)),
        "g1": jnp.ones((1, H), jnp.float32),     # LayerNorm defaults
        "be1": jnp.zeros((1, H), jnp.float32),
        "w2": lin_init(keys[2], H, (H, H4)),
        "b2": lin_init(keys[3], H, (1, H4)),
        "w3": lin_init(keys[4], H4, (H4, H)),
        "b3": lin_init(keys[5], H4, (1, H)),
        "w4": lin_init(keys[6], H, (H, output_dim)),
        "b4": lin_init(keys[7], H, (1, output_dim)),
        "g2": jnp.ones((1, output_dim), jnp.float32),
        "be2": jnp.zeros((1, output_dim), jnp.float32),
    }

    x = jax.random.normal(keys[8], (B, Q, input_dim), jnp.float32)
    ref = reference(x, params)

    # 1) Strict semantics check: f32 matmul operands, exact erf division.
    packed_f32 = pack_params(params, compute_dtype=jnp.float32)
    out_f32 = jax.block_until_ready(
        query_aware_classifier(x, packed_f32, approx_recip=False))
    assert out_f32.shape == (B, Q, output_dim), out_f32.shape
    err_f32 = float(jnp.max(jnp.abs(out_f32 - ref)))
    assert jnp.allclose(out_f32, ref, atol=1e-4, rtol=1e-4), f"f32 max abs err {err_f32}"

    # 2) Fast path: bf16 matmul operands (v5e/v6e/v7x MXU-native), f32 accumulation, and
    #    EUP approximate reciprocal in the erf polynomial. Checked at a bf16 tolerance.
    packed_bf16 = pack_params(params, compute_dtype=jnp.bfloat16)
    out_bf16 = jax.block_until_ready(
        query_aware_classifier(x, packed_bf16, approx_recip=True))
    err_bf16 = float(jnp.max(jnp.abs(out_bf16 - ref)))
    assert jnp.allclose(out_bf16, ref, atol=1e-1, rtol=1e-1), f"bf16 max abs err {err_bf16}"

    print("KERNEL_OK")
</pallas_src>

<mosaic_0001>
module attributes {stable_mosaic.version = 11 : i64} {
  func.func @qac_kernel(%arg0: i32, %arg1: memref<16x32xf32, #tpu.memory_space<vmem>>, %arg2: memref<4x64x64xf32, #tpu.memory_space<vmem>>, %arg3: memref<8x64xf32, #tpu.memory_space<vmem>>, %arg4: memref<16x16xf32, #tpu.memory_space<vmem>>) attributes {dimension_semantics = [#tpu.dimension_semantics<parallel>], iteration_bounds = array<i64: 1>, scalar_prefetch = 0 : i64, scratch_operands = 0 : i64, tpu.core_type = #tpu.core_type<tc>, window_params = [{transform_indices = @transform_0, window_bounds = array<i64: 16, 32>}, {pipeline_mode = #tpu.pipeline_mode<synchronous>, transform_indices = @transform_1, window_bounds = array<i64: 4, 64, 64>}, {pipeline_mode = #tpu.pipeline_mode<synchronous>, transform_indices = @transform_2, window_bounds = array<i64: 8, 64>}, {transform_indices = @transform_3, window_bounds = array<i64: 16, 16>}]} {
    %c0 = arith.constant 0 : index
    %c0_0 = arith.constant 0 : index
    %0 = vector.load %arg1[%c0, %c0_0] : memref<16x32xf32, #tpu.memory_space<vmem>>, vector<16x32xf32>
    %c0_1 = arith.constant 0 : index
    %c0_2 = arith.constant 0 : index
    %1 = vector.load %arg3[%c0_1, %c0_2] : memref<8x64xf32, #tpu.memory_space<vmem>>, vector<8x64xf32>
    %2 = vector.extract_strided_slice %1 {offsets = [0, 0], sizes = [1, 64], strides = [1, 1]} : vector<8x64xf32> to vector<1x64xf32>
    %3 = vector.extract_strided_slice %1 {offsets = [1, 0], sizes = [1, 64], strides = [1, 1]} : vector<8x64xf32> to vector<1x64xf32>
    %4 = vector.extract_strided_slice %1 {offsets = [2, 0], sizes = [1, 64], strides = [1, 1]} : vector<8x64xf32> to vector<1x64xf32>
    %5 = vector.extract_strided_slice %1 {offsets = [3, 0], sizes = [1, 16], strides = [1, 1]} : vector<8x64xf32> to vector<1x16xf32>
    %6 = vector.extract_strided_slice %1 {offsets = [4, 0], sizes = [1, 64], strides = [1, 1]} : vector<8x64xf32> to vector<1x64xf32>
    %7 = vector.extract_strided_slice %1 {offsets = [5, 0], sizes = [1, 16], strides = [1, 1]} : vector<8x64xf32> to vector<1x16xf32>
    %8 = vector.extract_strided_slice %1 {offsets = [6, 0], sizes = [1, 16], strides = [1, 1]} : vector<8x64xf32> to vector<1x16xf32>
    %9 = vector.extract_strided_slice %1 {offsets = [7, 0], sizes = [1, 16], strides = [1, 1]} : vector<8x64xf32> to vector<1x16xf32>
    %c0_3 = arith.constant 0 : index
    %c0_4 = arith.constant 0 : index
    %c0_5 = arith.constant 0 : index
    %10 = vector.load %arg2[%c0_3, %c0_4, %c0_5] : memref<4x64x64xf32, #tpu.memory_space<vmem>>, vector<1x32x64xf32>
    %11 = vector.shape_cast %10 : vector<1x32x64xf32> to vector<32x64xf32>
    %c1 = arith.constant 1 : index
    %c0_6 = arith.constant 0 : index
    %c0_7 = arith.constant 0 : index
    %12 = vector.load %arg2[%c1, %c0_6, %c0_7] : memref<4x64x64xf32, #tpu.memory_space<vmem>>, vector<1x64x16xf32>
    %13 = vector.shape_cast %12 : vector<1x64x16xf32> to vector<64x16xf32>
    %c2 = arith.constant 2 : index
    %c0_8 = arith.constant 0 : index
    %c0_9 = arith.constant 0 : index
    %14 = vector.load %arg2[%c2, %c0_8, %c0_9] : memref<4x64x64xf32, #tpu.memory_space<vmem>>, vector<1x16x64xf32>
    %15 = vector.shape_cast %14 : vector<1x16x64xf32> to vector<16x64xf32>
    %c3 = arith.constant 3 : index
    %c0_10 = arith.constant 0 : index
    %c0_11 = arith.constant 0 : index
    %16 = vector.load %arg2[%c3, %c0_10, %c0_11] : memref<4x64x64xf32, #tpu.memory_space<vmem>>, vector<1x64x16xf32>
    %17 = vector.shape_cast %16 : vector<1x64x16xf32> to vector<64x16xf32>
    %cst = arith.constant dense<0.000000e+00> : vector<16x64xf32>
    %18 = tpu.matmul %0, %11, %cst {dimension_numbers = #tpu.dot_dimension_numbers<[1], [0], [0], [1], [0, 0, 1, 1], [], []>} : vector<16x32xf32>, vector<32x64xf32>, vector<16x64xf32> -> vector<16x64xf32>
    %19 = vector.broadcast %2 : vector<1x64xf32> to vector<16x64xf32>
    %20 = arith.addf %18, %19 : vector<16x64xf32>
    %cst_12 = arith.constant dense<0.000000e+00> : vector<16xf32>
    %21 = vector.multi_reduction <add>, %20, %cst_12 [1] : vector<16x64xf32> to vector<16xf32>
    %22 = vector.shape_cast %21 : vector<16xf32> to vector<16x1xf32>
    %cst_13 = arith.constant 6.400000e+01 : f32
    %23 = vector.broadcast %cst_13 : f32 to vector<16x1xf32>
    %24 = arith.divf %22, %23 : vector<16x1xf32>
    %25 = arith.mulf %20, %20 : vector<16x64xf32>
    %cst_14 = arith.constant dense<0.000000e+00> : vector<16xf32>
    %26 = vector.multi_reduction <add>, %25, %cst_14 [1] : vector<16x64xf32> to vector<16xf32>
    %27 = vector.shape_cast %26 : vector<16xf32> to vector<16x1xf32>
    %cst_15 = arith.constant 6.400000e+01 : f32
    %28 = vector.broadcast %cst_15 : f32 to vector<16x1xf32>
    %29 = arith.divf %27, %28 : vector<16x1xf32>
    %30 = arith.mulf %24, %24 : vector<16x1xf32>
    %31 = arith.subf %29, %30 : vector<16x1xf32>
    %cst_16 = arith.constant 0.000000e+00 : f32
    %32 = vector.broadcast %cst_16 : f32 to vector<16x1xf32>
    %33 = arith.maximumf %31, %32 : vector<16x1xf32>
    %34 = vector.broadcast %24 : vector<16x1xf32> to vector<16x64xf32>
    %35 = arith.subf %20, %34 : vector<16x64xf32>
    %cst_17 = arith.constant 9.99999974E-6 : f32
    %36 = vector.broadcast %cst_17 : f32 to vector<16x1xf32>
    %37 = arith.addf %33, %36 : vector<16x1xf32>
    %38 = math.rsqrt %37 : vector<16x1xf32>
    %39 = vector.broadcast %38 : vector<16x1xf32> to vector<16x64xf32>
    %40 = arith.mulf %35, %39 : vector<16x64xf32>
    %41 = vector.broadcast %3 : vector<1x64xf32> to vector<16x64xf32>
    %42 = arith.mulf %40, %41 : vector<16x64xf32>
    %43 = vector.broadcast %4 : vector<1x64xf32> to vector<16x64xf32>
    %44 = arith.addf %42, %43 : vector<16x64xf32>
    %cst_18 = arith.constant 5.000000e-01 : f32
    %45 = vector.broadcast %cst_18 : f32 to vector<16x64xf32>
    %46 = arith.mulf %45, %44 : vector<16x64xf32>
    %cst_19 = arith.constant 0.707106769 : f32
    %47 = vector.broadcast %cst_19 : f32 to vector<16x64xf32>
    %48 = arith.mulf %44, %47 : vector<16x64xf32>
    %cst_20 = arith.constant 0.000000e+00 : f32
    %49 = vector.broadcast %cst_20 : f32 to vector<16x64xf32>
    %50 = arith.cmpf oge, %48, %49 : vector<16x64xf32>
    %cst_21 = arith.constant 1.000000e+00 : f32
    %cst_22 = arith.constant -1.000000e+00 : f32
    %51 = vector.broadcast %cst_21 : f32 to vector<16x64xf32>
    %52 = vector.broadcast %cst_22 : f32 to vector<16x64xf32>
    %53 = arith.select %50, %51, %52 : vector<16x64xi1>, vector<16x64xf32>
    %54 = math.absf %48 : vector<16x64xf32>
    %cst_23 = arith.constant 0.327591091 : f32
    %55 = vector.broadcast %cst_23 : f32 to vector<16x64xf32>
    %56 = arith.mulf %55, %54 : vector<16x64xf32>
    %cst_24 = arith.constant 1.000000e+00 : f32
    %57 = vector.broadcast %cst_24 : f32 to vector<16x64xf32>
    %58 = arith.addf %57, %56 : vector<16x64xf32>
    %cst_25 = arith.constant 1.000000e+00 : f32
    %59 = vector.broadcast %cst_25 : f32 to vector<16x64xf32>
    %60 = arith.divf %59, %58 : vector<16x64xf32>
    %cst_26 = arith.constant 1.06140542 : f32
    %61 = vector.broadcast %cst_26 : f32 to vector<16x64xf32>
    %62 = arith.mulf %60, %61 : vector<16x64xf32>
    %cst_27 = arith.constant -1.45315206 : f32
    %63 = vector.broadcast %cst_27 : f32 to vector<16x64xf32>
    %64 = arith.addf %63, %62 : vector<16x64xf32>
    %65 = arith.mulf %60, %64 : vector<16x64xf32>
    %cst_28 = arith.constant 1.42141378 : f32
    %66 = vector.broadcast %cst_28 : f32 to vector<16x64xf32>
    %67 = arith.addf %66, %65 : vector<16x64xf32>
    %68 = arith.mulf %60, %67 : vector<16x64xf32>
    %cst_29 = arith.constant -0.284496725 : f32
    %69 = vector.broadcast %cst_29 : f32 to vector<16x64xf32>
    %70 = arith.addf %69, %68 : vector<16x64xf32>
    %71 = arith.mulf %60, %70 : vector<16x64xf32>
    %cst_30 = arith.constant 0.254829586 : f32
    %72 = vector.broadcast %cst_30 : f32 to vector<16x64xf32>
    %73 = arith.addf %72, %71 : vector<16x64xf32>
    %74 = arith.mulf %60, %73 : vector<16x64xf32>
    %cst_31 = arith.constant 0.000000e+00 : f32
    %75 = vector.broadcast %cst_31 : f32 to vector<16x64xf32>
    %76 = arith.subf %75, %54 : vector<16x64xf32>
    %77 = arith.mulf %76, %54 : vector<16x64xf32>
    %78 = math.exp %77 : vector<16x64xf32>
    %79 = arith.mulf %74, %78 : vector<16x64xf32>
    %cst_32 = arith.constant 1.000000e+00 : f32
    %80 = vector.broadcast %cst_32 : f32 to vector<16x64xf32>
    %81 = arith.subf %80, %79 : vector<16x64xf32>
    %82 = arith.mulf %53, %81 : vector<16x64xf32>
    %cst_33 = arith.constant 1.000000e+00 : f32
    %83 = vector.broadcast %cst_33 : f32 to vector<16x64xf32>
    %84 = arith.addf %83, %82 : vector<16x64xf32>
    %85 = arith.mulf %46, %84 : vector<16x64xf32>
    %86 = vector.shape_cast %85 : vector<16x64xf32> to vector<2x8x64xf32>
    %cst_34 = arith.constant dense<0.000000e+00> : vector<2x64xf32>
    %87 = vector.multi_reduction <add>, %86, %cst_34 [1] : vector<2x8x64xf32> to vector<2x64xf32>
    %cst_35 = arith.constant 8.000000e+00 : f32
    %88 = vector.broadcast %cst_35 : f32 to vector<2x64xf32>
    %89 = arith.divf %87, %88 : vector<2x64xf32>
    %cst_36 = arith.constant dense<0.000000e+00> : vector<2x16xf32>
    %90 = tpu.matmul %89, %13, %cst_36 {dimension_numbers = #tpu.dot_dimension_numbers<[1], [0], [0], [1], [0, 0, 1, 1], [], []>} : vector<2x64xf32>, vector<64x16xf32>, vector<2x16xf32> -> vector<2x16xf32>
    %91 = vector.broadcast %5 : vector<1x16xf32> to vector<2x16xf32>
    %92 = arith.addf %90, %91 : vector<2x16xf32>
    %cst_37 = arith.constant 0.000000e+00 : f32
    %93 = vector.broadcast %cst_37 : f32 to vector<2x16xf32>
    %94 = arith.maximumf %92, %93 : vector<2x16xf32>
    %cst_38 = arith.constant dense<0.000000e+00> : vector<2x64xf32>
    %95 = tpu.matmul %94, %15, %cst_38 {dimension_numbers = #tpu.dot_dimension_numbers<[1], [0], [0], [1], [0, 0, 1, 1], [], []>} : vector<2x16xf32>, vector<16x64xf32>, vector<2x64xf32> -> vector<2x64xf32>
    %96 = vector.broadcast %6 : vector<1x64xf32> to vector<2x64xf32>
    %97 = arith.addf %95, %96 : vector<2x64xf32>
    %98 = arith.negf %97 : vector<2x64xf32>
    %99 = math.exp %98 : vector<2x64xf32>
    %cst_39 = arith.constant 1.000000e+00 : f32
    %100 = vector.broadcast %cst_39 : f32 to vector<2x64xf32>
    %101 = arith.addf %100, %99 : vector<2x64xf32>
    %102 = arith.divf %100, %101 : vector<2x64xf32>
    %103 = vector.shape_cast %102 : vector<2x64xf32> to vector<2x1x64xf32>
    %104 = vector.broadcast %103 : vector<2x1x64xf32> to vector<2x8x64xf32>
    %105 = arith.mulf %86, %104 : vector<2x8x64xf32>
    %106 = vector.shape_cast %105 : vector<2x8x64xf32> to vector<16x64xf32>
    %cst_40 = arith.constant dense<0.000000e+00> : vector<16x16xf32>
    %107 = tpu.matmul %106, %17, %cst_40 {dimension_numbers = #tpu.dot_dimension_numbers<[1], [0], [0], [1], [0, 0, 1, 1], [], []>} : vector<16x64xf32>, vector<64x16xf32>, vector<16x16xf32> -> vector<16x16xf32>
    %108 = vector.broadcast %7 : vector<1x16xf32> to vector<16x16xf32>
    %109 = arith.addf %107, %108 : vector<16x16xf32>
    %cst_41 = arith.constant dense<0.000000e+00> : vector<16xf32>
    %110 = vector.multi_reduction <add>, %109, %cst_41 [1] : vector<16x16xf32> to vector<16xf32>
    %111 = vector.shape_cast %110 : vector<16xf32> to vector<16x1xf32>
    %cst_42 = arith.constant 1.600000e+01 : f32
    %112 = vector.broadcast %cst_42 : f32 to vector<16x1xf32>
    %113 = arith.divf %111, %112 : vector<16x1xf32>
    %114 = arith.mulf %109, %109 : vector<16x16xf32>
    %cst_43 = arith.constant dense<0.000000e+00> : vector<16xf32>
    %115 = vector.multi_reduction <add>, %114, %cst_43 [1] : vector<16x16xf32> to vector<16xf32>
    %116 = vector.shape_cast %115 : vector<16xf32> to vector<16x1xf32>
    %cst_44 = arith.constant 1.600000e+01 : f32
    %117 = vector.broadcast %cst_44 : f32 to vector<16x1xf32>
    %118 = arith.divf %116, %117 : vector<16x1xf32>
    %119 = arith.mulf %113, %113 : vector<16x1xf32>
    %120 = arith.subf %118, %119 : vector<16x1xf32>
    %cst_45 = arith.constant 0.000000e+00 : f32
    %121 = vector.broadcast %cst_45 : f32 to vector<16x1xf32>
    %122 = arith.maximumf %120, %121 : vector<16x1xf32>
    %123 = vector.broadcast %113 : vector<16x1xf32> to vector<16x16xf32>
    %124 = arith.subf %109, %123 : vector<16x16xf32>
    %cst_46 = arith.constant 9.99999974E-6 : f32
    %125 = vector.broadcast %cst_46 : f32 to vector<16x1xf32>
    %126 = arith.addf %122, %125 : vector<16x1xf32>
    %127 = math.rsqrt %126 : vector<16x1xf32>
    %128 = vector.broadcast %127 : vector<16x1xf32> to vector<16x16xf32>
    %129 = arith.mulf %124, %128 : vector<16x16xf32>
    %130 = vector.broadcast %8 : vector<1x16xf32> to vector<16x16xf32>
    %131 = arith.mulf %129, %130 : vector<16x16xf32>
    %132 = vector.broadcast %9 : vector<1x16xf32> to vector<16x16xf32>
    %133 = arith.addf %131, %132 : vector<16x16xf32>
    %c0_47 = arith.constant 0 : index
    %c0_48 = arith.constant 0 : index
    %134 = vector.load %arg4[%c0_47, %c0_48] : memref<16x16xf32, #tpu.memory_space<vmem>>, vector<16x16xf32>
    tpu.vector_store %arg4[%c0_47, %c0_48], %133 {strides = array<i32>} : memref<16x16xf32, #tpu.memory_space<vmem>>, vector<16x16xf32>,
    return
  }
  func.func @transform_0(%arg0: i32) -> (i32, i32) {
    %c0_i32 = arith.constant 0 : i32
    %c0_i32_0 = arith.constant 0 : i32
    return %arg0, %c0_i32 : i32, i32
  }
  func.func @transform_1(%arg0: i32) -> (i32, i32, i32) {
    %c0_i32 = arith.constant 0 : i32
    %c0_i32_0 = arith.constant 0 : i32
    %c0_i32_1 = arith.constant 0 : i32
    %c0_i32_2 = arith.constant 0 : i32
    return %c0_i32, %c0_i32_0, %c0_i32_1 : i32, i32, i32
  }
  func.func @transform_2(%arg0: i32) -> (i32, i32) {
    %c0_i32 = arith.constant 0 : i32
    %c0_i32_0 = arith.constant 0 : i32
    %c0_i32_1 = arith.constant 0 : i32
    return %c0_i32, %c0_i32_0 : i32, i32
  }
  func.func @transform_3(%arg0: i32) -> (i32, i32) {
    %c0_i32 = arith.constant 0 : i32
    %c0_i32_0 = arith.constant 0 : i32
    return %arg0, %c0_i32 : i32, i32
  }
}

</mosaic_0001>

<llo_original>
// kernel: tpu_custom_call.1
$region0: #{tpu_custom_call.1}
  #allocation0 [shape = 'u32[]', space=smem, size = 0x4, offset = 0x4, fixed_abs, tag = 'smem constant byte address 0x4 - core index']
  #allocation1 [shape = 'u32[144,128]{1,0:T(1,128)}', space=vmem, size = 0x12000, scoped, tag = 'internal scratch']
  %s0 = inlined_call_operand.hbm [shape: f32[16,32], index: 0, kind: input, shape index: {}]
  %s1 = inlined_call_operand.hbm [shape: f32[4,64,64], index: 1, kind: input, shape index: {}]
  %s2 = inlined_call_operand.hbm [shape: f32[8,64], index: 2, kind: input, shape index: {}]
  %s3 = inlined_call_operand.hbm [shape: f32[16,16], index: 3, kind: output, shape index: {}]
  %s4 = sld [smem:[#allocation0]]
  $region34: #{tpu_custom_call.1} parent=0
    _
  %s6 = ssub.s32 1, %s4
  %s7 = scalar_select 0, %s6, %s4
  $region1: #{tpu_custom_call.1} parent=0
    #allocation2 [shape = 'u8[8192]{0}', space=vmem, size = 0x2000, scoped, tag = 'input window, operand 0, single buffered']
    #allocation3 [shape = 's32[1]{0}', space=sflag, size = 0x4, scoped, tag = 'scoped memory for tpu_custom_call.1']
    #allocation4 [shape = 's32[1]{0}', space=sflag, size = 0x4, scoped, tag = 'scoped memory for tpu_custom_call.1']
    #allocation5 [shape = 'u8[131072]{0}', space=vmem, size = 0x20000, scoped, tag = 'input window, operand 1, single buffered']
    #allocation6 [shape = 's32[1]{0}', space=sflag, size = 0x4, scoped, tag = 'scoped memory for tpu_custom_call.1']
    #allocation7 [shape = 'u8[4096]{0}', space=vmem, size = 0x1000, scoped, tag = 'input window, operand 2, single buffered']
    #allocation8 [shape = 'u8[8192]{0}', space=vmem, size = 0x2000, scoped, tag = 'output window, operand 0, single buffered']
    %8 = vsyncpa [#allocation3], 0
    %9 = vsyncpa [#allocation6], 0
    %10 = vsyncpa [#allocation4], 0
    // Predicated region
    $region2: #{tpu_custom_call.1} parent=1 // pred_check
      _
    $region3: #{tpu_custom_call.1} parent=1 // pred_check_branch
      %12 = sbr.rel (0) target = $region5
    $region4: #{tpu_custom_call.1} parent=1 // pred_region
      %s14 = ssub.s32 256, 256
      %15 = vsyncadd [#allocation3], %s14
      %s16 = sshll.u32 [#allocation2], 4
      %s17 = int_to_ptr.vmem [resolvable:$true] %s16
      %22 = dma.hbm_to_vmem [thread:$0]  %s0, 256, %s17, [#allocation3], 128, 128, 8
    $region5: #{tpu_custom_call.1} parent=1 // pred_fallthru
      _
    // Predicated region
    $region6: #{tpu_custom_call.1} parent=1 // pred_check
      _
    $region7: #{tpu_custom_call.1} parent=1 // pred_check_branch
      %24 = sbr.rel (0) target = $region9
    $region8: #{tpu_custom_call.1} parent=1 // pred_region
      %s26 = ssub.s32 4096, 4096
      %27 = vsyncadd [#allocation6], %s26
      %s28 = sshll.u32 [#allocation5], 4
      %s29 = int_to_ptr.vmem [resolvable:$true] %s28
      %34 = dma.hbm_to_vmem [thread:$0]  %s1, 4096, %s29, [#allocation6], 128, 128, 8
    $region9: #{tpu_custom_call.1} parent=1 // pred_fallthru
      _
    // Predicated region
    $region10: #{tpu_custom_call.1} parent=1 // pred_check
      _
    $region11: #{tpu_custom_call.1} parent=1 // pred_check_branch
      %36 = sbr.rel (0) target = $region13
    $region12: #{tpu_custom_call.1} parent=1 // pred_region
      %s38 = ssub.s32 128, 128
      %39 = vsyncadd [#allocation6], %s38
      %s41 = sshll.u32 [#allocation7], 4
      %s42 = int_to_ptr.vmem [resolvable:$true] %s41
      %44 = dma.hbm_to_vmem [thread:$0]  %s2, 128, %s42, [#allocation6]
    $region13: #{tpu_custom_call.1} parent=1 // pred_fallthru
      _
    // Predicated region
    $region14: #{tpu_custom_call.1} parent=1 // pred_check
      _
    $region15: #{tpu_custom_call.1} parent=1 // pred_check_branch
      %46 = sbr.rel (0) target = $region17
    $region16: #{tpu_custom_call.1} parent=1 // pred_region
      %47 = dma.done [#allocation3], 256
    $region17: #{tpu_custom_call.1} parent=1 // pred_fallthru
      _
    // Predicated region
    $region18: #{tpu_custom_call.1} parent=1 // pred_check
      _
    $region19: #{tpu_custom_call.1} parent=1 // pred_check_branch
      %49 = sbr.rel (0) target = $region21
    $region20: #{tpu_custom_call.1} parent=1 // pred_region
      %50 = dma.done [#allocation6], 4096
    $region21: #{tpu_custom_call.1} parent=1 // pred_fallthru
      _
    // Predicated region
    $region22: #{tpu_custom_call.1} parent=1 // pred_check
      _
    $region23: #{tpu_custom_call.1} parent=1 // pred_check_branch
      %52 = sbr.rel (0) target = $region25
    $region24: #{tpu_custom_call.1} parent=1 // pred_region
      %53 = dma.done [#allocation6], 128
    $region25: #{tpu_custom_call.1} parent=1 // pred_fallthru
      _
    %v54 = vld [vmem:[#allocation2] sm:$0xff]
    %v55 = vld [vmem:[#allocation2 + $0x8] sm:$0xff]
    %v56 = vld [vmem:[#allocation7] sm:$0xff]
    %v57 = vld [vmem:[#allocation5] sm:$0xff]
    %v58 = vld [vmem:[#allocation5 + $0x8] sm:$0xff]
    %v59 = vld [vmem:[#allocation5 + $0x10] sm:$0xff]
    %v60 = vld [vmem:[#allocation5 + $0x18] sm:$0xff]
    %s61 = scalar_lea.vmem [#allocation5], 64
    %v62 = vld [vmem:[%s61] sm:$0xff]
    %v63 = vld [vmem:[%s61 + $0x8] sm:$0xff]
    %v64 = vld [vmem:[%s61 + $0x10] sm:$0xff]
    %v65 = vld [vmem:[%s61 + $0x18] sm:$0xff]
    %v66 = vld [vmem:[%s61 + $0x20] sm:$0xff]
    %v67 = vld [vmem:[%s61 + $0x28] sm:$0xff]
    %v68 = vld [vmem:[%s61 + $0x30] sm:$0xff]
    %v69 = vld [vmem:[%s61 + $0x38] sm:$0xff]
    %s70 = scalar_lea.vmem [#allocation5], 128
    %v71 = vld [vmem:[%s70] sm:$0xff]
    %v72 = vld [vmem:[%s70 + $0x8] sm:$0xff]
    %s73 = scalar_lea.vmem [#allocation5], 192
    %v74 = vld [vmem:[%s73] sm:$0xff]
    %v75 = vld [vmem:[%s73 + $0x8] sm:$0xff]
    %v76 = vld [vmem:[%s73 + $0x10] sm:$0xff]
    %v77 = vld [vmem:[%s73 + $0x18] sm:$0xff]
    %v78 = vld [vmem:[%s73 + $0x20] sm:$0xff]
    %v79 = vld [vmem:[%s73 + $0x28] sm:$0xff]
    %v80 = vld [vmem:[%s73 + $0x30] sm:$0xff]
    %v81 = vld [vmem:[%s73 + $0x38] sm:$0xff]
    %v82 = vlaneseq
    %v83 = vshrl.u32 %v82, 7
    %v84 = vsub.s32 0, %v83
    %v85 = vrot.slane %v56, %v84
    %vm86 = vcmask 261120
    %v88 = vsel %vm86, %v54, 0
    %v91 = vsel %vm86, %v55, 0
    %93 = vmatprep.subr.mxu0 0.0
    %94 = vmatpush1.msra.mxu0 0.0
    %95 = vmatprep.subr.mxu0 0.0
    %96 = vmatpush1.msra.mxu0 0.0
    %97 = vmatprep.subr.mxu0 0.0
    %98 = vmatpush1.msra.mxu0 0.0
    %99 = vmatprep.subr.mxu0 0.0
    %100 = vmatpush1.msra.mxu0 0.0
    %101 = vmatprep.subr.mxu0 0.0
    %102 = vmatpush1.msra.mxu0 0.0
    %103 = vmatprep.subr.mxu0 0.0
    %104 = vmatpush1.msra.mxu0 0.0
    %105 = vmatprep.subr.mxu0 0.0
    %106 = vmatpush1.msra.mxu0 0.0
    %107 = vmatprep.subr.mxu0 0.0
    %108 = vmatpush1.msra.mxu0 0.0
    %109 = vmatprep.subr.mxu0 0.0
    %110 = vmatpush1.msra.mxu0 0.0
    %111 = vmatprep.subr.mxu0 0.0
    %112 = vmatpush1.msra.mxu0 0.0
    %113 = vmatprep.subr.mxu0 0.0
    %114 = vmatpush1.msra.mxu0 0.0
    %115 = vmatprep.subr.mxu0 0.0
    %116 = vmatpush1.msra.mxu0 0.0
    %117 = vmatprep.subr.mxu0 0.0
    %118 = vmatpush1.msra.mxu0 %v60
    %119 = vmatprep.subr.mxu0 0.0
    %120 = vmatpush1.msra.mxu0 %v59
    %121 = vmatprep.subr.mxu0 0.0
    %122 = vmatpush1.msra.mxu0 %v58
    %123 = vmatprep.subr.mxu0 0.0
    %124 = vmatpush1.msra.mxu0 %v57
    %125 = vmatprep.subr.mxu0 0.0
    %126 = vmatpush2.msra.mxu0 0.0
    %127 = vmatprep.subr.mxu0 0.0
    %128 = vmatpush2.msra.mxu0 0.0
    %129 = vmatprep.subr.mxu0 0.0
    %130 = vmatpush2.msra.mxu0 0.0
    %131 = vmatprep.subr.mxu0 0.0
    %132 = vmatpush2.msra.mxu0 0.0
    %133 = vmatprep.subr.mxu0 0.0
    %134 = vmatpush2.msra.mxu0 0.0
    %135 = vmatprep.subr.mxu0 0.0
    %136 = vmatpush2.msra.mxu0 0.0
    %137 = vmatprep.subr.mxu0 0.0
    %138 = vmatpush2.msra.mxu0 0.0
    %139 = vmatprep.subr.mxu0 0.0
    %140 = vmatpush2.msra.mxu0 0.0
    %141 = vmatprep.subr.mxu0 0.0
    %142 = vmatpush2.msra.mxu0 0.0
    %143 = vmatprep.subr.mxu0 0.0
    %144 = vmatpush2.msra.mxu0 0.0
    %145 = vmatprep.subr.mxu0 0.0
    %146 = vmatpush2.msra.mxu0 0.0
    %147 = vmatprep.subr.mxu0 0.0
    %148 = vmatpush2.msra.mxu0 0.0
    %149 = vmatprep.subr.mxu0 0.0
    %150 = vmatpush2.msra.mxu0 0.0
    %151 = vmatprep.subr.mxu0 0.0
    %152 = vmatpush2.msra.mxu0 0.0
    %153 = vmatprep.subr.mxu0 0.0
    %154 = vmatpush2.msra.mxu0 0.0
    %155 = vmatprep.subr.mxu0 0.0
    %156 = vmatpush2.msra.mxu0 0.0
    %157 = vmatprep.mubr.f32.mxu0 0.0
    %158 = vmatmul.mubr.f32.gmra.mxu0 %v88
    %v159 = vpop.f32.mrf.mxu0
    %v160 = vadd.f32 %v85, %v159
    %v161 = vpop.f32.mrf.mxu0
    %162 = vmatprep.mubr.f32.mxu0 0.0
    %163 = vmatmul.mubr.f32.gmra.mxu0 %v91
    %v164 = vpop.f32.mrf.mxu0
    %v165 = vadd.f32 %v85, %v164
    %v166 = vpop.f32.mrf.mxu0
    %167 = vdwg.mxu0
    %vm168 = vcmask 523264
    %v169 = vsel %vm168, %v160, 0.0
    %170 = vadd.xlane.f32.xlu0 %v169
    %v171 = vpop.xlane.xlu0 %170
    %v172 = vsel %vm168, %v165, 0.0
    %173 = vadd.xlane.f32.xlu0 %v172
    %v174 = vpop.xlane.xlu0 %173
    %v175 = vrcp.pop 64.0
    %v176 = vmul.f32 %v171, %v175
    %v177 = vmul.f32 %v174, %v175
    %v178 = vmul.f32 %v160, %v160
    %v179 = vmul.f32 %v165, %v165
    %v180 = vsel %vm168, %v178, 0.0
    %181 = vadd.xlane.f32.xlu0 %v180
    %v182 = vpop.xlane.xlu0 %181
    %v183 = vsel %vm168, %v179, 0.0
    %184 = vadd.xlane.f32.xlu0 %v183
    %v185 = vpop.xlane.xlu0 %184
    %v186 = vmul.f32 %v182, %v175
    %v187 = vmul.f32 %v185, %v175
    %v188 = vmul.f32 %v176, %v176
    %v189 = vmul.f32 %v177, %v177
    %v190 = vsub.f32 %v186, %v188
    %v191 = vsub.f32 %v187, %v189
    %v192 = vmax.f32 %v190, 0.0
    %v193 = vmax.f32 %v191, 0.0
    %v194 = vsub.f32 %v160, %v176
    %v195 = vsub.f32 %v165, %v177
    %v196 = vadd.f32 %v192, 1e-05
    %v197 = vadd.f32 %v193, 1e-05
    %v198 = vrsqrt.pop %v196
    %v199 = vrsqrt.pop %v197
    %v200 = vmul.f32 %v194, %v198
    %v201 = vmul.f32 %v195, %v199
    %v202 = vlaneseq
    %v203 = vshrl.u32 %v202, 7
    %v204 = vsub.s32 1, %v203
    %v205 = vrot.slane %v56, %v204
    %v206 = vmul.f32 %v200, %v205
    %v207 = vmul.f32 %v201, %v205
    %v208 = vlaneseq
    %v209 = vshrl.u32 %v208, 7
    %v210 = vsub.s32 2, %v209
    %v211 = vrot.slane %v56, %v210
    %v212 = vadd.f32 %v206, %v211
    %v213 = vadd.f32 %v207, %v211
    %v214 = vmul.f32 %v212, 0.5
    %v215 = vmul.f32 %v213, 0.5
    %v216 = vmul.f32 %v212, 0.70710677
    %v217 = vmul.f32 %v213, 0.70710677
    %vm218 = vcmp.ge.f32.partialorder %v216, 0.0
    %vm219 = vcmp.ge.f32.partialorder %v217, 0.0
    %v220 = vsel %vm218, 1.0, -1.0
    %v221 = vsel %vm219, 1.0, -1.0
    %v222 = vand.u32 2147483647, %v216
    %v223 = vand.u32 2147483647, %v217
    %v224 = vmul.f32 %v222, 0.3275911
    %v225 = vmul.f32 %v223, 0.3275911
    %v226 = vadd.f32 %v224, 1.0
    %v227 = vadd.f32 %v225, 1.0
    %v228 = vrcp.pop %v226
    %v229 = vmul.f32 1.0, %v228
    %v230 = vrcp.pop %v227
    %v231 = vmul.f32 1.0, %v230
    %v232 = vmul.f32 %v229, 1.0614054
    %v233 = vmul.f32 %v231, 1.0614054
    %v234 = vadd.f32 %v232, -1.4531521
    %v235 = vadd.f32 %v233, -1.4531521
    %v236 = vmul.f32 %v229, %v234
    %v237 = vmul.f32 %v231, %v235
    %v238 = vadd.f32 %v236, 1.4214138
    %v239 = vadd.f32 %v237, 1.4214138
    %v240 = vmul.f32 %v229, %v238
    %v241 = vmul.f32 %v231, %v239
    %v242 = vadd.f32 %v240, -0.28449672
    %v243 = vadd.f32 %v241, -0.28449672
    %v244 = vmul.f32 %v229, %v242
    %v245 = vmul.f32 %v231, %v243
    %v246 = vadd.f32 %v244, 0.2548296
    %v247 = vadd.f32 %v245, 0.2548296
    %v248 = vmul.f32 %v229, %v246
    %v249 = vmul.f32 %v231, %v247
    %v250 = vsub.f32 0.0, %v222
    %v251 = vsub.f32 0.0, %v223
    %v252 = vmul.f32 %v250, %v222
    %v253 = vmul.f32 %v251, %v223
    %v254 = vmul.f32 %v252, 1.442695
    %v255 = vpow.pop %v254
    %v256 = vmul.f32 %v253, 1.442695
    %v257 = vpow.pop %v256
    %v258 = vmul.f32 %v248, %v255
    %v259 = vmul.f32 %v249, %v257
    %v260 = vsub.f32 1.0, %v258
    %v261 = vsub.f32 1.0, %v259
    %v262 = vmul.f32 %v220, %v260
    %v263 = vmul.f32 %v221, %v261
    %v264 = vadd.f32 %v262, 1.0
    %v265 = vadd.f32 %v263, 1.0
    %v266 = vmul.f32 %v214, %v264
    %v267 = vmul.f32 %v215, %v265
    %v268 = vsel %vm168, %v266, 0.0
    %v269 = vrot.slane %v268, 4
    %v270 = vadd.f32 %v268, %v269
    %v271 = vrot.slane %v270, 2
    %v272 = vadd.f32 %v270, %v271
    %v273 = vrot.slane %v272, 1
    %v274 = vadd.f32 %v272, %v273
    %v275 = vsel %vm168, %v267, 0.0
    %v276 = vrot.slane %v275, 4
    %v277 = vadd.f32 %v275, %v276
    %v278 = vrot.slane %v277, 2
    %v279 = vadd.f32 %v277, %v278
    %v280 = vrot.slane %v279, 1
    %v281 = vadd.f32 %v279, %v280
    %v282 = vrcp.pop 8.0
    %v283 = vmul.f32 %v274, %v282
    %v284 = vmul.f32 %v281, %v282
    %v285 = vlaneseq
    %v286 = vshrl.u32 %v285, 7
    %v287 = vsub.s32 3, %v286
    %v288 = vrot.slane %v56, %v287
    %vm291 = vcmask 1041409
    %v292 = vsel %vm291, %v284, %v283
    %v293 = vsel %vm168, %v292, 0
    %295 = vmatprep.subr.mxu0 0.0
    %296 = vmatpush1.msra.mxu0 0.0
    %297 = vmatprep.subr.mxu0 0.0
    %298 = vmatpush1.msra.mxu0 0.0
    %299 = vmatprep.subr.mxu0 0.0
    %300 = vmatpush1.msra.mxu0 0.0
    %301 = vmatprep.subr.mxu0 0.0
    %302 = vmatpush1.msra.mxu0 0.0
    %303 = vmatprep.subr.mxu0 0.0
    %304 = vmatpush1.msra.mxu0 0.0
    %305 = vmatprep.subr.mxu0 0.0
    %306 = vmatpush1.msra.mxu0 0.0
    %307 = vmatprep.subr.mxu0 0.0
    %308 = vmatpush1.msra.mxu0 0.0
    %309 = vmatprep.subr.mxu0 0.0
    %310 = vmatpush1.msra.mxu0 0.0
    %311 = vmatprep.subr.mxu0 0.0
    %312 = vmatpush1.msra.mxu0 %v69
    %313 = vmatprep.subr.mxu0 0.0
    %314 = vmatpush1.msra.mxu0 %v68
    %315 = vmatprep.subr.mxu0 0.0
    %316 = vmatpush1.msra.mxu0 %v67
    %317 = vmatprep.subr.mxu0 0.0
    %318 = vmatpush1.msra.mxu0 %v66
    %319 = vmatprep.subr.mxu0 0.0
    %320 = vmatpush1.msra.mxu0 %v65
    %321 = vmatprep.subr.mxu0 0.0
    %322 = vmatpush1.msra.mxu0 %v64
    %323 = vmatprep.subr.mxu0 0.0
    %324 = vmatpush1.msra.mxu0 %v63
    %325 = vmatprep.subr.mxu0 0.0
    %326 = vmatpush1.msra.mxu0 %v62
    %327 = vmatprep.subr.mxu0 0.0
    %328 = vmatpush2.msra.mxu0 0.0
    %329 = vmatprep.subr.mxu0 0.0
    %330 = vmatpush2.msra.mxu0 0.0
    %331 = vmatprep.subr.mxu0 0.0
    %332 = vmatpush2.msra.mxu0 0.0
    %333 = vmatprep.subr.mxu0 0.0
    %334 = vmatpush2.msra.mxu0 0.0
    %335 = vmatprep.subr.mxu0 0.0
    %336 = vmatpush2.msra.mxu0 0.0
    %337 = vmatprep.subr.mxu0 0.0
    %338 = vmatpush2.msra.mxu0 0.0
    %339 = vmatprep.subr.mxu0 0.0
    %340 = vmatpush2.msra.mxu0 0.0
    %341 = vmatprep.subr.mxu0 0.0
    %342 = vmatpush2.msra.mxu0 0.0
    %343 = vmatprep.subr.mxu0 0.0
    %344 = vmatpush2.msra.mxu0 0.0
    %345 = vmatprep.subr.mxu0 0.0
    %346 = vmatpush2.msra.mxu0 0.0
    %347 = vmatprep.subr.mxu0 0.0
    %348 = vmatpush2.msra.mxu0 0.0
    %349 = vmatprep.subr.mxu0 0.0
    %350 = vmatpush2.msra.mxu0 0.0
    %351 = vmatprep.subr.mxu0 0.0
    %352 = vmatpush2.msra.mxu0 0.0
    %353 = vmatprep.subr.mxu0 0.0
    %354 = vmatpush2.msra.mxu0 0.0
    %355 = vmatprep.subr.mxu0 0.0
    %356 = vmatpush2.msra.mxu0 0.0
    %357 = vmatprep.subr.mxu0 0.0
    %358 = vmatpush2.msra.mxu0 0.0
    %359 = vmatprep.mubr.f32.mxu0 0.0
    %360 = vmatmul.mubr.f32.gmra.mxu0 %v293
    %v361 = vpop.f32.mrf.mxu0
    %v362 = vadd.f32 %v288, %v361
    %v363 = vpop.f32.mrf.mxu0
    %364 = vdwg.mxu0
    %v365 = vmax.f32 %v362, 0.0
    %v366 = vlaneseq
    %v367 = vshrl.u32 %v366, 7
    %v368 = vsub.s32 4, %v367
    %v369 = vrot.slane %v56, %v368
    %vm370 = vcmask 130048
    %v372 = vsel %vm370, %v365, 0
    %374 = vmatprep.subr.mxu0 0.0
    %375 = vmatpush1.msra.mxu0 0.0
    %376 = vmatprep.subr.mxu0 0.0
    %377 = vmatpush1.msra.mxu0 0.0
    %378 = vmatprep.subr.mxu0 0.0
    %379 = vmatpush1.msra.mxu0 0.0
    %380 = vmatprep.subr.mxu0 0.0
    %381 = vmatpush1.msra.mxu0 0.0
    %382 = vmatprep.subr.mxu0 0.0
    %383 = vmatpush1.msra.mxu0 0.0
    %384 = vmatprep.subr.mxu0 0.0
    %385 = vmatpush1.msra.mxu0 0.0
    %386 = vmatprep.subr.mxu0 0.0
    %387 = vmatpush1.msra.mxu0 0.0
    %388 = vmatprep.subr.mxu0 0.0
    %389 = vmatpush1.msra.mxu0 0.0
    %390 = vmatprep.subr.mxu0 0.0
    %391 = vmatpush1.msra.mxu0 0.0
    %392 = vmatprep.subr.mxu0 0.0
    %393 = vmatpush1.msra.mxu0 0.0
    %394 = vmatprep.subr.mxu0 0.0
    %395 = vmatpush1.msra.mxu0 0.0
    %396 = vmatprep.subr.mxu0 0.0
    %397 = vmatpush1.msra.mxu0 0.0
    %398 = vmatprep.subr.mxu0 0.0
    %399 = vmatpush1.msra.mxu0 0.0
    %400 = vmatprep.subr.mxu0 0.0
    %401 = vmatpush1.msra.mxu0 0.0
    %402 = vmatprep.subr.mxu0 0.0
    %403 = vmatpush1.msra.mxu0 %v72
    %404 = vmatprep.subr.mxu0 0.0
    %405 = vmatpush1.msra.mxu0 %v71
    %406 = vmatprep.subr.mxu0 0.0
    %407 = vmatpush2.msra.mxu0 0.0
    %408 = vmatprep.subr.mxu0 0.0
    %409 = vmatpush2.msra.mxu0 0.0
    %410 = vmatprep.subr.mxu0 0.0
    %411 = vmatpush2.msra.mxu0 0.0
    %412 = vmatprep.subr.mxu0 0.0
    %413 = vmatpush2.msra.mxu0 0.0
    %414 = vmatprep.subr.mxu0 0.0
    %415 = vmatpush2.msra.mxu0 0.0
    %416 = vmatprep.subr.mxu0 0.0
    %417 = vmatpush2.msra.mxu0 0.0
    %418 = vmatprep.subr.mxu0 0.0
    %419 = vmatpush2.msra.mxu0 0.0
    %420 = vmatprep.subr.mxu0 0.0
    %421 = vmatpush2.msra.mxu0 0.0
    %422 = vmatprep.subr.mxu0 0.0
    %423 = vmatpush2.msra.mxu0 0.0
    %424 = vmatprep.subr.mxu0 0.0
    %425 = vmatpush2.msra.mxu0 0.0
    %426 = vmatprep.subr.mxu0 0.0
    %427 = vmatpush2.msra.mxu0 0.0
    %428 = vmatprep.subr.mxu0 0.0
    %429 = vmatpush2.msra.mxu0 0.0
    %430 = vmatprep.subr.mxu0 0.0
    %431 = vmatpush2.msra.mxu0 0.0
    %432 = vmatprep.subr.mxu0 0.0
    %433 = vmatpush2.msra.mxu0 0.0
    %434 = vmatprep.subr.mxu0 0.0
    %435 = vmatpush2.msra.mxu0 0.0
    %436 = vmatprep.subr.mxu0 0.0
    %437 = vmatpush2.msra.mxu0 0.0
    %438 = vmatprep.mubr.f32.mxu0 0.0
    %439 = vmatmul.mubr.f32.gmra.mxu0 %v372
    %v440 = vpop.f32.mrf.mxu0
    %v441 = vadd.f32 %v369, %v440
    %v442 = vpop.f32.mrf.mxu0
    %443 = vdwg.mxu0
    %v444 = vxor.u32 %v441, 2147483648
    %v445 = vmul.f32 %v444, 1.442695
    %v446 = vpow.pop %v445
    %v447 = vadd.f32 %v446, 1.0
    %v448 = vrcp.pop %v447
    %v449 = vmul.f32 1.0, %v448
    %v452 = vunpack.c.l.s4 1966171168
    %v453 = vunpack.c.0.s8 %v452
    %v454 = vlaneseq
    %v455 = vshrl.u32 %v454, 7
    %v456 = vsub.s32 %v453, %v455
    %v457 = vrot.slane %v449, %v456
    %v458 = vcombine.high %v457, %v457
    %v460 = vunpack.c.l.s4 1966171168
    %v461 = vunpack.c.0.s8 %v460
    %v462 = vlaneseq
    %v463 = vshrl.u32 %v462, 7
    %v464 = vsub.s32 %v461, %v463
    %v465 = vrot.slane %v457, %v464
    %v467 = vunpack.c.l.s4 1966171168
    %v468 = vunpack.c.0.s8 %v467
    %v469 = vlaneseq
    %v470 = vshrl.u32 %v469, 7
    %v471 = vsub.s32 %v468, %v470
    %v472 = vrot.slane %v458, %v471
    %v473 = vlaneseq
    %v474 = vshrl.u32 %v473, 7
    %v475 = vsub.s32 0, %v474
    %v476 = vrot.slane %v465, %v475
    %v477 = vlaneseq
    %v478 = vshrl.u32 %v477, 7
    %v479 = vsub.s32 0, %v478
    %v480 = vrot.slane %v472, %v479
    %v483 = vmul.f32 %v266, %v476
    %v484 = vmul.f32 %v267, %v480
    %v485 = vlaneseq
    %v486 = vshrl.u32 %v485, 7
    %v487 = vsub.s32 5, %v486
    %v488 = vrot.slane %v56, %v487
    %v490 = vsel %vm168, %v483, 0
    %v493 = vsel %vm168, %v484, 0
    %495 = vmatprep.subr.mxu0 0.0
    %496 = vmatpush1.msra.mxu0 0.0
    %497 = vmatprep.subr.mxu0 0.0
    %498 = vmatpush1.msra.mxu0 0.0
    %499 = vmatprep.subr.mxu0 0.0
    %500 = vmatpush1.msra.mxu0 0.0
    %501 = vmatprep.subr.mxu0 0.0
    %502 = vmatpush1.msra.mxu0 0.0
    %503 = vmatprep.subr.mxu0 0.0
    %504 = vmatpush1.msra.mxu0 0.0
    %505 = vmatprep.subr.mxu0 0.0
    %506 = vmatpush1.msra.mxu0 0.0
    %507 = vmatprep.subr.mxu0 0.0
    %508 = vmatpush1.msra.mxu0 0.0
    %509 = vmatprep.subr.mxu0 0.0
    %510 = vmatpush1.msra.mxu0 0.0
    %511 = vmatprep.subr.mxu0 0.0
    %512 = vmatpush1.msra.mxu0 %v81
    %513 = vmatprep.subr.mxu0 0.0
    %514 = vmatpush1.msra.mxu0 %v80
    %515 = vmatprep.subr.mxu0 0.0
    %516 = vmatpush1.msra.mxu0 %v79
    %517 = vmatprep.subr.mxu0 0.0
    %518 = vmatpush1.msra.mxu0 %v78
    %519 = vmatprep.subr.mxu0 0.0
    %520 = vmatpush1.msra.mxu0 %v77
    %521 = vmatprep.subr.mxu0 0.0
    %522 = vmatpush1.msra.mxu0 %v76
    %523 = vmatprep.subr.mxu0 0.0
    %524 = vmatpush1.msra.mxu0 %v75
    %525 = vmatprep.subr.mxu0 0.0
    %526 = vmatpush1.msra.mxu0 %v74
    %527 = vmatprep.subr.mxu0 0.0
    %528 = vmatpush2.msra.mxu0 0.0
    %529 = vmatprep.subr.mxu0 0.0
    %530 = vmatpush2.msra.mxu0 0.0
    %531 = vmatprep.subr.mxu0 0.0
    %532 = vmatpush2.msra.mxu0 0.0
    %533 = vmatprep.subr.mxu0 0.0
    %534 = vmatpush2.msra.mxu0 0.0
    %535 = vmatprep.subr.mxu0 0.0
    %536 = vmatpush2.msra.mxu0 0.0
    %537 = vmatprep.subr.mxu0 0.0
    %538 = vmatpush2.msra.mxu0 0.0
    %539 = vmatprep.subr.mxu0 0.0
    %540 = vmatpush2.msra.mxu0 0.0
    %541 = vmatprep.subr.mxu0 0.0
    %542 = vmatpush2.msra.mxu0 0.0
    %543 = vmatprep.subr.mxu0 0.0
    %544 = vmatpush2.msra.mxu0 0.0
    %545 = vmatprep.subr.mxu0 0.0
    %546 = vmatpush2.msra.mxu0 0.0
    %547 = vmatprep.subr.mxu0 0.0
    %548 = vmatpush2.msra.mxu0 0.0
    %549 = vmatprep.subr.mxu0 0.0
    %550 = vmatpush2.msra.mxu0 0.0
    %551 = vmatprep.subr.mxu0 0.0
    %552 = vmatpush2.msra.mxu0 0.0
    %553 = vmatprep.subr.mxu0 0.0
    %554 = vmatpush2.msra.mxu0 0.0
    %555 = vmatprep.subr.mxu0 0.0
    %556 = vmatpush2.msra.mxu0 0.0
    %557 = vmatprep.subr.mxu0 0.0
    %558 = vmatpush2.msra.mxu0 0.0
    %559 = vmatprep.mubr.f32.mxu0 0.0
    %560 = vmatmul.mubr.f32.gmra.mxu0 %v490
    %v561 = vpop.f32.mrf.mxu0
    %v562 = vadd.f32 %v488, %v561
    %v563 = vpop.f32.mrf.mxu0
    %564 = vmatprep.mubr.f32.mxu0 0.0
    %565 = vmatmul.mubr.f32.gmra.mxu0 %v493
    %v566 = vpop.f32.mrf.mxu0
    %v567 = vadd.f32 %v488, %v566
    %v568 = vpop.f32.mrf.mxu0
    %569 = vdwg.mxu0
    %v570 = vsel %vm370, %v562, 0.0
    %571 = vadd.xlane.f32.xlu0 %v570
    %v572 = vpop.xlane.xlu0 %571
    %v573 = vsel %vm370, %v567, 0.0
    %574 = vadd.xlane.f32.xlu0 %v573
    %v575 = vpop.xlane.xlu0 %574
    %v576 = vrcp.pop 16.0
    %v577 = vmul.f32 %v572, %v576
    %v578 = vmul.f32 %v575, %v576
    %v579 = vmul.f32 %v562, %v562
    %v580 = vmul.f32 %v567, %v567
    %v581 = vsel %vm370, %v579, 0.0
    %582 = vadd.xlane.f32.xlu0 %v581
    %v583 = vpop.xlane.xlu0 %582
    %v584 = vsel %vm370, %v580, 0.0
    %585 = vadd.xlane.f32.xlu0 %v584
    %v586 = vpop.xlane.xlu0 %585
    %v587 = vmul.f32 %v583, %v576
    %v588 = vmul.f32 %v586, %v576
    %v589 = vmul.f32 %v577, %v577
    %v590 = vmul.f32 %v578, %v578
    %v591 = vsub.f32 %v587, %v589
    %v592 = vsub.f32 %v588, %v590
    %v593 = vmax.f32 %v591, 0.0
    %v594 = vmax.f32 %v592, 0.0
    %v595 = vsub.f32 %v562, %v577
    %v596 = vsub.f32 %v567, %v578
    %v597 = vadd.f32 %v593, 1e-05
    %v598 = vadd.f32 %v594, 1e-05
    %v599 = vrsqrt.pop %v597
    %v600 = vrsqrt.pop %v598
    %v601 = vmul.f32 %v595, %v599
    %v602 = vmul.f32 %v596, %v600
    %v603 = vlaneseq
    %v604 = vshrl.u32 %v603, 7
    %v605 = vsub.s32 6, %v604
    %v606 = vrot.slane %v56, %v605
    %v607 = vmul.f32 %v601, %v606
    %v608 = vmul.f32 %v602, %v606
    %v609 = vlaneseq
    %v610 = vshrl.u32 %v609, 7
    %v611 = vsub.s32 7, %v610
    %v612 = vrot.slane %v56, %v611
    %v613 = vadd.f32 %v607, %v612
    %v614 = vadd.f32 %v608, %v612
    %615 = vst.msk [vmem:[#allocation8] sm:$0xff] %vm370, %v613
    %616 = vst.msk [vmem:[#allocation8 + $0x8] sm:$0xff] %vm370, %v614
    // Predicated region
    $region26: #{tpu_custom_call.1} parent=1 // pred_check
      _
    $region27: #{tpu_custom_call.1} parent=1 // pred_check_branch
      %618 = sbr.rel (0) target = $region29
    $region28: #{tpu_custom_call.1} parent=1 // pred_region
      %s620 = ssub.s32 256, 256
      %621 = vsyncadd [#allocation4], %s620
      %s622 = sshll.u32 [#allocation8], 4
      %s623 = int_to_ptr.vmem [resolvable:$true] %s622
      %628 = dma.vmem_to_hbm [thread:$0]  %s623, 256, %s3, [#allocation4], 128, 128, 8
    $region29: #{tpu_custom_call.1} parent=1 // pred_fallthru
      _
    // Predicated region
    $region30: #{tpu_custom_call.1} parent=1 // pred_check
      _
    $region31: #{tpu_custom_call.1} parent=1 // pred_check_branch
      %630 = sbr.rel (0) target = $region33
    $region32: #{tpu_custom_call.1} parent=1 // pred_region
      %631 = dma.done [#allocation4], 256
    $region33: #{tpu_custom_call.1} parent=1 // pred_fallthru
      _
    %632 = vsyncpa [#allocation3], 1
    %633 = vsyncpa [#allocation6], 1
    %634 = vsyncpa [#allocation4], 1

</llo_original>
